<compile_context>
chip_gen: v6e
topology: v6e:2x2x1
jax: 0.10.0
libtpu: 0.0.40
codegen_flags: <defaults>
</compile_context>

<pallas_src>
import jax
import jax.numpy as jnp
from jax import lax
from jax.experimental import pallas as pl
from jax.experimental.pallas import tpu as pltpu

_LANES = 128
_MAX_TILE_ROWS = 4096            # 4096*128*4B = 2 MiB per f32 input block
_MIN_BLOCKS_FOR_CORE_SPLIT = 8   # only shard across TCs when there is real work


def _round_up(x, m):
    return ((x + m - 1) // m) * m


def _make_kl_kernel(n_total, tile_rows, blocks_per_core):
    tile_elems = tile_rows * _LANES

    def kernel(mu_q_ref, std_q_ref, mu_p_ref, std_p_ref, acc_ref):
        # acc_ref: (1, 8, 128) f32 output block, resident across the reduction axis.
        @pl.when(pl.program_id(1) == 0)
        def _init():
            acc_ref[...] = jnp.zeros_like(acc_ref)

        # Upcast per tile (inputs may be bf16); all arithmetic in f32.
        mu_q = mu_q_ref[...].astype(jnp.float32)
        std_q = std_q_ref[...].astype(jnp.float32)
        mu_p = mu_p_ref[...].astype(jnp.float32)
        std_p = std_p_ref[...].astype(jnp.float32)

        inv_p = 1.0 / std_p                                   # one reciprocal / elem
        ratio = std_q * inv_p
        z = (mu_q - mu_p) * inv_p
        kl = 0.5 * (ratio * ratio + z * z) - jnp.log(ratio) - 0.5   # one log / elem

        # In-kernel ragged-tail mask: zero out everything past the true element
        # count BEFORE accumulation.  This also neutralizes garbage in partially
        # filled edge blocks and the clamped duplicate block of an odd 2-core
        # split.  (int32 flat index; fine for < 2^31 elements.)
        blk = pl.program_id(0) * blocks_per_core + pl.program_id(1)
        base = blk * tile_elems
        row = lax.broadcasted_iota(jnp.int32, (tile_rows, _LANES), 0)
        lane = lax.broadcasted_iota(jnp.int32, (tile_rows, _LANES), 1)
        flat_idx = base + row * _LANES + lane
        kl = jnp.where(flat_idx < n_total, kl, 0.0)

        # Elementwise accumulation into a vreg-shaped partial sum (no per-tile
        # cross-lane reduce): fold (TR, 128) -> (TR//8, 8, 128), sum major axis.
        acc_ref[...] += kl.reshape(tile_rows // 8, 8, _LANES).sum(axis=0, keepdims=True)

    return kernel


def kl_loss(mu_q, std_q, mu_p, std_p, *, max_tile_rows=_MAX_TILE_ROWS):
    """Scalar mean(KL(q || p)) for diagonal Gaussians q=N(mu_q,std_q), p=N(mu_p,std_p)."""
    assert mu_q.shape == std_q.shape == mu_p.shape == std_p.shape
    n_total = int(mu_q.size)
    assert n_total > 0

    # Sublane-group granularity: 8 rows (f32), 16 (bf16), 32 (int8/fp8).
    g = max(max(8, 32 // jnp.dtype(x.dtype).itemsize)
            for x in (mu_q, std_q, mu_p, std_p))

    rows = pl.cdiv(n_total, _LANES)
    # Fast path: no HBM re-materialization when the flat size is already
    # lane-aligned and there is at least one full sublane group of rows.
    if n_total % _LANES == 0 and rows >= g:
        rows_hbm = rows
        pad = 0
    else:
        rows_hbm = _round_up(rows, g)          # pad only to the next group boundary
        pad = rows_hbm * _LANES - n_total

    tile_rows = min(_round_up(max_tile_rows, g), (rows_hbm // g) * g)
    num_blocks = pl.cdiv(rows_hbm, tile_rows)
    num_cores = 2 if num_blocks >= _MIN_BLOCKS_FOR_CORE_SPLIT else 1
    blocks_per_core = pl.cdiv(num_blocks, num_cores)
    extra = num_cores * blocks_per_core - num_blocks   # 0 or 1

    # Padding (when needed) is KL-neutral (mu=0, std=1) and is additionally
    # zeroed by the in-kernel mask.
    def _prep(x, pad_value):
        flat = x.reshape(-1)                   # keep native dtype (no f32 cast)
        if pad:
            flat = jnp.pad(flat, (0, pad), constant_values=pad_value)
        return flat.reshape(rows_hbm, _LANES)

    inputs = (_prep(mu_q, 0), _prep(std_q, 1), _prep(mu_p, 0), _prep(std_p, 1))

    if extra:
        # Odd block count on a 2-core split: clamp the duplicate block index;
        # its contribution is masked to zero inside the kernel.
        def in_map(c, i):
            return (jnp.minimum(c * blocks_per_core + i, num_blocks - 1), 0)
    else:
        def in_map(c, i):
            return (c * blocks_per_core + i, 0)

    in_spec = pl.BlockSpec((tile_rows, _LANES), in_map)

    partials = pl.pallas_call(
        _make_kl_kernel(n_total, tile_rows, blocks_per_core),
        out_shape=jax.ShapeDtypeStruct((num_cores, 8, _LANES), jnp.float32),
        grid_spec=pltpu.PrefetchScalarGridSpec(
            num_scalar_prefetch=0,
            grid=(num_cores, blocks_per_core),
            in_specs=[in_spec] * 4,
            out_specs=pl.BlockSpec((1, 8, _LANES), lambda c, i: (c, 0, 0)),
        ),
        compiler_params=pltpu.CompilerParams(
            dimension_semantics=("parallel", "arbitrary"),
            vmem_limit_bytes=40 << 20),
    )(*inputs)

    # Final tiny (num_cores, 8, 128) reduce + normalization by TRUE element count.
    return jnp.sum(partials) / jnp.float32(n_total)


def _kl_loss_ref(mu_q, std_q, mu_p, std_p):
    mu_q = mu_q.astype(jnp.float32)
    mu_p = mu_p.astype(jnp.float32)
    std_q = std_q.astype(jnp.float32)
    std_p = std_p.astype(jnp.float32)
    var_q = std_q ** 2
    var_p = std_p ** 2
    kl = (jnp.log(std_p) - jnp.log(std_q)
          + (var_q + (mu_q - mu_p) ** 2) / (2.0 * var_p)
          - 0.5)
    return jnp.mean(kl)


if __name__ == "__main__":
    key = jax.random.PRNGKey(0)

    def make_inputs(shape, k, dtype=jnp.float32):
        k1, k2, k3, k4 = jax.random.split(k, 4)
        mu_q = jax.random.normal(k1, shape, dtype=dtype)
        mu_p = jax.random.normal(k2, shape, dtype=dtype)
        std_q = jnp.exp(0.2 * jax.random.normal(k3, shape, dtype=jnp.float32)).astype(dtype)
        std_p = jnp.exp(0.2 * jax.random.normal(k4, shape, dtype=jnp.float32)).astype(dtype)
        return mu_q, std_q, mu_p, std_p

    keys = jax.random.split(key, 3)

    # Case 1: VAE-sized (batch=2, hidden=32). Ragged tail (64 < 128), single block.
    args = make_inputs((2, 32), keys[0])
    out = jax.block_until_ready(kl_loss(*args))
    ref = _kl_loss_ref(*args)
    assert jnp.allclose(out, ref, rtol=1e-5, atol=1e-5), (out, ref)

    # Case 2: ragged tail + multiple reduction blocks (resident accumulator across
    # the "arbitrary" axis, minimal KL-neutral padding + in-kernel mask).
    args = make_inputs((4, 555), keys[1])
    out = jax.block_until_ready(kl_loss(*args, max_tile_rows=8))
    ref = _kl_loss_ref(*args)
    assert jnp.allclose(out, ref, rtol=1e-5, atol=1e-5), (out, ref)

    # Case 3: lane-aligned fast path (no padding), odd block count + 2-core split
    # (clamped duplicate block must be masked to zero).
    args = make_inputs((8, 1152), keys[2])
    out = jax.block_until_ready(kl_loss(*args, max_tile_rows=8))
    ref = _kl_loss_ref(*args)
    assert jnp.allclose(out, ref, rtol=1e-5, atol=1e-5), (out, ref)

    print("KERNEL_OK")
</pallas_src>

<mosaic_0001>
module attributes {stable_mosaic.version = 11 : i64} {
  func.func @kernel(%arg0: i32, %arg1: i32, %arg2: memref<8x128xf32, #tpu.memory_space<vmem>>, %arg3: memref<8x128xf32, #tpu.memory_space<vmem>>, %arg4: memref<8x128xf32, #tpu.memory_space<vmem>>, %arg5: memref<8x128xf32, #tpu.memory_space<vmem>>, %arg6: memref<1x8x128xf32, #tpu.memory_space<vmem>>) attributes {dimension_semantics = [#tpu.dimension_semantics<parallel>, #tpu.dimension_semantics<arbitrary>], iteration_bounds = array<i64: 1, 1>, scalar_prefetch = 0 : i64, scratch_operands = 0 : i64, tpu.core_type = #tpu.core_type<tc>, window_params = [{transform_indices = @transform_0, window_bounds = array<i64: 8, 128>}, {transform_indices = @transform_1, window_bounds = array<i64: 8, 128>}, {transform_indices = @transform_2, window_bounds = array<i64: 8, 128>}, {transform_indices = @transform_3, window_bounds = array<i64: 8, 128>}, {transform_indices = @transform_4, window_bounds = array<i64: 1, 8, 128>}]} {
    %c0_i32 = arith.constant 0 : i32
    %0 = arith.cmpi eq, %arg1, %c0_i32 : i32
    %1 = arith.extui %0 : i1 to i32
    %c0_i32_0 = arith.constant 0 : i32
    %2 = arith.cmpi ne, %1, %c0_i32_0 : i32
    scf.if %2 {
      %cst_18 = arith.constant 0.000000e+00 : f32
      %41 = vector.broadcast %cst_18 : f32 to vector<1x8x128xf32>
      %c0_19 = arith.constant 0 : index
      %c0_20 = arith.constant 0 : index
      %c0_21 = arith.constant 0 : index
      %42 = vector.load %arg6[%c0_19, %c0_20, %c0_21] : memref<1x8x128xf32, #tpu.memory_space<vmem>>, vector<1x8x128xf32>
      tpu.vector_store %arg6[%c0_19, %c0_20, %c0_21], %41 {strides = array<i32>} : memref<1x8x128xf32, #tpu.memory_space<vmem>>, vector<1x8x128xf32>,
    } else {
    }
    %c0 = arith.constant 0 : index
    %c0_1 = arith.constant 0 : index
    %3 = vector.load %arg2[%c0, %c0_1] : memref<8x128xf32, #tpu.memory_space<vmem>>, vector<8x128xf32>
    %c0_2 = arith.constant 0 : index
    %c0_3 = arith.constant 0 : index
    %4 = vector.load %arg3[%c0_2, %c0_3] : memref<8x128xf32, #tpu.memory_space<vmem>>, vector<8x128xf32>
    %c0_4 = arith.constant 0 : index
    %c0_5 = arith.constant 0 : index
    %5 = vector.load %arg4[%c0_4, %c0_5] : memref<8x128xf32, #tpu.memory_space<vmem>>, vector<8x128xf32>
    %c0_6 = arith.constant 0 : index
    %c0_7 = arith.constant 0 : index
    %6 = vector.load %arg5[%c0_6, %c0_7] : memref<8x128xf32, #tpu.memory_space<vmem>>, vector<8x128xf32>
    %cst = arith.constant 1.000000e+00 : f32
    %7 = vector.broadcast %cst : f32 to vector<8x128xf32>
    %8 = arith.divf %7, %6 : vector<8x128xf32>
    %9 = arith.mulf %4, %8 : vector<8x128xf32>
    %10 = arith.subf %3, %5 : vector<8x128xf32>
    %11 = arith.mulf %10, %8 : vector<8x128xf32>
    %12 = arith.mulf %9, %9 : vector<8x128xf32>
    %13 = arith.mulf %11, %11 : vector<8x128xf32>
    %14 = arith.addf %12, %13 : vector<8x128xf32>
    %cst_8 = arith.constant 5.000000e-01 : f32
    %15 = vector.broadcast %cst_8 : f32 to vector<8x128xf32>
    %16 = arith.mulf %15, %14 : vector<8x128xf32>
    %17 = math.log %9 : vector<8x128xf32>
    %18 = arith.subf %16, %17 : vector<8x128xf32>
    %cst_9 = arith.constant 5.000000e-01 : f32
    %19 = vector.broadcast %cst_9 : f32 to vector<8x128xf32>
    %20 = arith.subf %18, %19 : vector<8x128xf32>
    %c1_i32 = arith.constant 1 : i32
    %21 = arith.muli %arg0, %c1_i32 : i32
    %22 = arith.addi %21, %arg1 : i32
    %c1024_i32 = arith.constant 1024 : i32
    %23 = arith.muli %22, %c1024_i32 : i32
    %24 = tpu.iota {dimensions = array<i32: 0>} : vector<8x128xi32>
    %25 = tpu.iota {dimensions = array<i32: 1>} : vector<8x128xi32>
    %c128_i32 = arith.constant 128 : i32
    %26 = vector.broadcast %c128_i32 : i32 to vector<8x128xi32>
    %27 = arith.muli %24, %26 : vector<8x128xi32>
    %28 = vector.broadcast %23 : i32 to vector<8x128xi32>
    %29 = arith.addi %28, %27 : vector<8x128xi32>
    %30 = arith.addi %29, %25 : vector<8x128xi32>
    %c64_i32 = arith.constant 64 : i32
    %31 = vector.broadcast %c64_i32 : i32 to vector<8x128xi32>
    %32 = arith.cmpi slt, %30, %31 : vector<8x128xi32>
    %cst_10 = arith.constant 0.000000e+00 : f32
    %33 = vector.broadcast %cst_10 : f32 to vector<8x128xf32>
    %34 = arith.select %32, %20, %33 : vector<8x128xi1>, vector<8x128xf32>
    %c0_11 = arith.constant 0 : index
    %c0_12 = arith.constant 0 : index
    %c0_13 = arith.constant 0 : index
    %35 = vector.load %arg6[%c0_11, %c0_12, %c0_13] : memref<1x8x128xf32, #tpu.memory_space<vmem>>, vector<1x8x128xf32>
    %36 = vector.shape_cast %34 : vector<8x128xf32> to vector<1x8x128xf32>
    %cst_14 = arith.constant dense<0.000000e+00> : vector<8x128xf32>
    %37 = vector.multi_reduction <add>, %36, %cst_14 [0] : vector<1x8x128xf32> to vector<8x128xf32>
    %38 = vector.shape_cast %37 : vector<8x128xf32> to vector<1x8x128xf32>
    %39 = arith.addf %35, %38 : vector<1x8x128xf32>
    %c0_15 = arith.constant 0 : index
    %c0_16 = arith.constant 0 : index
    %c0_17 = arith.constant 0 : index
    %40 = vector.load %arg6[%c0_15, %c0_16, %c0_17] : memref<1x8x128xf32, #tpu.memory_space<vmem>>, vector<1x8x128xf32>
    tpu.vector_store %arg6[%c0_15, %c0_16, %c0_17], %39 {strides = array<i32>} : memref<1x8x128xf32, #tpu.memory_space<vmem>>, vector<1x8x128xf32>,
    return
  }
  func.func @transform_0(%arg0: i32, %arg1: i32) -> (i32, i32) {
    %c1_i32 = arith.constant 1 : i32
    %0 = arith.muli %arg0, %c1_i32 : i32
    %1 = arith.addi %0, %arg1 : i32
    %c0_i32 = arith.constant 0 : i32
    %c0_i32_0 = arith.constant 0 : i32
    return %1, %c0_i32 : i32, i32
  }
  func.func @transform_1(%arg0: i32, %arg1: i32) -> (i32, i32) {
    %c1_i32 = arith.constant 1 : i32
    %0 = arith.muli %arg0, %c1_i32 : i32
    %1 = arith.addi %0, %arg1 : i32
    %c0_i32 = arith.constant 0 : i32
    %c0_i32_0 = arith.constant 0 : i32
    return %1, %c0_i32 : i32, i32
  }
  func.func @transform_2(%arg0: i32, %arg1: i32) -> (i32, i32) {
    %c1_i32 = arith.constant 1 : i32
    %0 = arith.muli %arg0, %c1_i32 : i32
    %1 = arith.addi %0, %arg1 : i32
    %c0_i32 = arith.constant 0 : i32
    %c0_i32_0 = arith.constant 0 : i32
    return %1, %c0_i32 : i32, i32
  }
  func.func @transform_3(%arg0: i32, %arg1: i32) -> (i32, i32) {
    %c1_i32 = arith.constant 1 : i32
    %0 = arith.muli %arg0, %c1_i32 : i32
    %1 = arith.addi %0, %arg1 : i32
    %c0_i32 = arith.constant 0 : i32
    %c0_i32_0 = arith.constant 0 : i32
    return %1, %c0_i32 : i32, i32
  }
  func.func @transform_4(%arg0: i32, %arg1: i32) -> (i32, i32, i32) {
    %c0_i32 = arith.constant 0 : i32
    %c0_i32_0 = arith.constant 0 : i32
    %c0_i32_1 = arith.constant 0 : i32
    return %arg0, %c0_i32, %c0_i32_0 : i32, i32, i32
  }
}

</mosaic_0001>

<llo_original>
// kernel: tpu_custom_call.1
$region0: #{tpu_custom_call.1}
  #allocation0 [shape = 'u32[]', space=smem, size = 0x4, offset = 0x4, fixed_abs, tag = 'smem constant byte address 0x4 - core index']
  #allocation1 [shape = 'u32[144,128]{1,0:T(1,128)}', space=vmem, size = 0x12000, scoped, tag = 'internal scratch']
  %s0 = inlined_call_operand.hbm [shape: f32[8,128], index: 0, kind: input, shape index: {}]
  %s1 = inlined_call_operand.hbm [shape: f32[8,128], index: 1, kind: input, shape index: {}]
  %s2 = inlined_call_operand.hbm [shape: f32[8,128], index: 2, kind: input, shape index: {}]
  %s3 = inlined_call_operand.hbm [shape: f32[8,128], index: 3, kind: input, shape index: {}]
  %s4 = inlined_call_operand.hbm [shape: f32[1,8,128], index: 4, kind: output, shape index: {}]
  %s5 = sld [smem:[#allocation0]]
  $region46: #{tpu_custom_call.1} parent=0
    _
  %s7 = ssub.s32 1, %s5
  %s8 = scalar_select 0, %s7, %s5
  $region1: #{tpu_custom_call.1} parent=0
    #allocation2 [shape = 'u8[4096]{0}', space=vmem, size = 0x1000, scoped, tag = 'input window, operand 0, single buffered']
    #allocation3 [shape = 's32[1]{0}', space=sflag, size = 0x4, scoped, tag = 'scoped memory for tpu_custom_call.1']
    #allocation4 [shape = 's32[1]{0}', space=sflag, size = 0x4, scoped, tag = 'scoped memory for tpu_custom_call.1']
    #allocation5 [shape = 'u8[4096]{0}', space=vmem, size = 0x1000, scoped, tag = 'input window, operand 1, single buffered']
    #allocation6 [shape = 's32[1]{0}', space=sflag, size = 0x4, scoped, tag = 'scoped memory for tpu_custom_call.1']
    #allocation7 [shape = 'u8[4096]{0}', space=vmem, size = 0x1000, scoped, tag = 'input window, operand 2, single buffered']
    #allocation8 [shape = 'u8[4096]{0}', space=vmem, size = 0x1000, scoped, tag = 'input window, operand 3, single buffered']
    #allocation9 [shape = 's32[1]{0}', space=sflag, size = 0x4, scoped, tag = 'scoped memory for tpu_custom_call.1']
    #allocation10 [shape = 'u8[4096]{0}', space=vmem, size = 0x1000, scoped, tag = 'output window, operand 0, single buffered']
    %9 = vsyncpa [#allocation3], 0
    %10 = vsyncpa [#allocation6], 0
    %11 = vsyncpa [#allocation9], 0
    %12 = vsyncpa [#allocation4], 0
    // Predicated region
    $region2: #{tpu_custom_call.1} parent=1 // pred_check
      _
    $region3: #{tpu_custom_call.1} parent=1 // pred_check_branch
      %14 = sbr.rel (0) target = $region5
    $region4: #{tpu_custom_call.1} parent=1 // pred_region
      %s15 = sadd.s32 0, 0
      %s17 = ssub.s32 128, 128
      %18 = vsyncadd [#allocation3], %s17
      %s19 = smul.addr %s15, 128
      %s20 = scalar_lea.hbm %s0, %s19
      %s22 = sshll.u32 [#allocation2], 4
      %s23 = int_to_ptr.vmem [resolvable:$true] %s22
      %25 = dma.hbm_to_vmem [thread:$0]  %s20, 128, %s23, [#allocation3]
    $region5: #{tpu_custom_call.1} parent=1 // pred_fallthru
      _
    // Predicated region
    $region6: #{tpu_custom_call.1} parent=1 // pred_check
      _
    $region7: #{tpu_custom_call.1} parent=1 // pred_check_branch
      %27 = sbr.rel (0) target = $region9
    $region8: #{tpu_custom_call.1} parent=1 // pred_region
      %s28 = sadd.s32 0, 0
      %s30 = ssub.s32 128, 128
      %31 = vsyncadd [#allocation6], %s30
      %s32 = smul.addr %s28, 128
      %s33 = scalar_lea.hbm %s1, %s32
      %s35 = sshll.u32 [#allocation5], 4
      %s36 = int_to_ptr.vmem [resolvable:$true] %s35
      %38 = dma.hbm_to_vmem [thread:$0]  %s33, 128, %s36, [#allocation6]
    $region9: #{tpu_custom_call.1} parent=1 // pred_fallthru
      _
    // Predicated region
    $region10: #{tpu_custom_call.1} parent=1 // pred_check
      _
    $region11: #{tpu_custom_call.1} parent=1 // pred_check_branch
      %40 = sbr.rel (0) target = $region13
    $region12: #{tpu_custom_call.1} parent=1 // pred_region
      %s41 = sadd.s32 0, 0
      %s43 = ssub.s32 128, 128
      %44 = vsyncadd [#allocation6], %s43
      %s45 = smul.addr %s41, 128
      %s46 = scalar_lea.hbm %s2, %s45
      %s48 = sshll.u32 [#allocation7], 4
      %s49 = int_to_ptr.vmem [resolvable:$true] %s48
      %51 = dma.hbm_to_vmem [thread:$0]  %s46, 128, %s49, [#allocation6]
    $region13: #{tpu_custom_call.1} parent=1 // pred_fallthru
      _
    // Predicated region
    $region14: #{tpu_custom_call.1} parent=1 // pred_check
      _
    $region15: #{tpu_custom_call.1} parent=1 // pred_check_branch
      %53 = sbr.rel (0) target = $region17
    $region16: #{tpu_custom_call.1} parent=1 // pred_region
      %s54 = sadd.s32 0, 0
      %s56 = ssub.s32 128, 128
      %57 = vsyncadd [#allocation9], %s56
      %s58 = smul.addr %s54, 128
      %s59 = scalar_lea.hbm %s3, %s58
      %s61 = sshll.u32 [#allocation8], 4
      %s62 = int_to_ptr.vmem [resolvable:$true] %s61
      %64 = dma.hbm_to_vmem [thread:$0]  %s59, 128, %s62, [#allocation9]
    $region17: #{tpu_custom_call.1} parent=1 // pred_fallthru
      _
    // Predicated region
    $region18: #{tpu_custom_call.1} parent=1 // pred_check
      _
    $region19: #{tpu_custom_call.1} parent=1 // pred_check_branch
      %66 = sbr.rel (0) target = $region21
    $region20: #{tpu_custom_call.1} parent=1 // pred_region
      %67 = dma.done [#allocation3], 128
    $region21: #{tpu_custom_call.1} parent=1 // pred_fallthru
      _
    // Predicated region
    $region22: #{tpu_custom_call.1} parent=1 // pred_check
      _
    $region23: #{tpu_custom_call.1} parent=1 // pred_check_branch
      %69 = sbr.rel (0) target = $region25
    $region24: #{tpu_custom_call.1} parent=1 // pred_region
      %70 = dma.done [#allocation6], 128
    $region25: #{tpu_custom_call.1} parent=1 // pred_fallthru
      _
    // Predicated region
    $region26: #{tpu_custom_call.1} parent=1 // pred_check
      _
    $region27: #{tpu_custom_call.1} parent=1 // pred_check_branch
      %72 = sbr.rel (0) target = $region29
    $region28: #{tpu_custom_call.1} parent=1 // pred_region
      %73 = dma.done [#allocation6], 128
    $region29: #{tpu_custom_call.1} parent=1 // pred_fallthru
      _
    // Predicated region
    $region30: #{tpu_custom_call.1} parent=1 // pred_check
      _
    $region31: #{tpu_custom_call.1} parent=1 // pred_check_branch
      %75 = sbr.rel (0) target = $region33
    $region32: #{tpu_custom_call.1} parent=1 // pred_region
      %76 = dma.done [#allocation9], 128
    $region33: #{tpu_custom_call.1} parent=1 // pred_fallthru
      _
    %s77 = sadd.s32 0, 0
    %s78 = sadd.s32 0, 0
    %s79 = sadd.s32 0, 0
    %s80 = sadd.s32 0, 0
    %p81 = scmp.eq.s32.totalorder 0, 0
    // Predicated region
    $region34: #{tpu_custom_call.1} parent=1 // pred_check
      %p82 = pneg %p81
    $region35: #{tpu_custom_call.1} parent=1 // pred_check_branch
      %84 = sbr.rel (%p82) target = $region37
    $region36: #{tpu_custom_call.1} parent=1 // pred_region
      %85 = vst [vmem:[#allocation10] sm:$0xff] 0.0
    $region37: #{tpu_custom_call.1} parent=1 // pred_fallthru
      _
    %v86 = vld [vmem:[#allocation2] sm:$0xff]
    %v87 = vld [vmem:[#allocation5] sm:$0xff]
    %v88 = vld [vmem:[#allocation7] sm:$0xff]
    %v89 = vld [vmem:[#allocation8] sm:$0xff]
    %v90 = vrcp.pop %v89
    %v91 = vmul.f32 1.0, %v90
    %v92 = vmul.f32 %v87, %v91
    %v93 = vsub.f32 %v86, %v88
    %v94 = vmul.f32 %v93, %v91
    %v95 = vmul.f32 %v92, %v92
    %v96 = vmul.f32 %v94, %v94
    %v97 = vadd.f32 %v95, %v96
    %v98 = vmul.f32 %v97, 0.5
    %v99 = vlog2.pop %v92
    %v100 = vmul.f32 %v99, 0.6931472
    %v101 = vsub.f32 %v98, %v100
    %v102 = vsub.f32 %v101, 0.5
    %s103 = sadd.s32 0, 0
    %s104 = smul.u32 %s103, 1024
    %v105 = vlaneseq
    %v106 = vshrl.u32 %v105, 7
    %v107 = vlaneseq
    %v108 = vand.u32 %v107, 127
    %v109 = vmul.u32 %v106, 128
    %v110 = vstv %s104
    %v111 = vadd.s32 %v110, %v109
    %v112 = vadd.s32 %v111, %v108
    %vm113 = vcmp.lt.s32.totalorder %v112, 64
    %v114 = vsel %vm113, %v102, 0.0
    %v115 = vld [vmem:[#allocation10] sm:$0xff]
    %v116 = vadd.f32 %v114, 0.0
    %v117 = vadd.f32 %v115, %v116
    %118 = vst [vmem:[#allocation10] sm:$0xff] %v117
    // Predicated region
    $region38: #{tpu_custom_call.1} parent=1 // pred_check
      _
    $region39: #{tpu_custom_call.1} parent=1 // pred_check_branch
      %120 = sbr.rel (0) target = $region41
    $region40: #{tpu_custom_call.1} parent=1 // pred_region
      %s122 = ssub.s32 128, 128
      %123 = vsyncadd [#allocation4], %s122
      %s125 = sshll.u32 [#allocation10], 4
      %s126 = int_to_ptr.vmem [resolvable:$true] %s125
      %128 = dma.vmem_to_hbm [thread:$0]  %s126, 128, %s4, [#allocation4]
    $region41: #{tpu_custom_call.1} parent=1 // pred_fallthru
      _
    // Predicated region
    $region42: #{tpu_custom_call.1} parent=1 // pred_check
      _
    $region43: #{tpu_custom_call.1} parent=1 // pred_check_branch
      %130 = sbr.rel (0) target = $region45
    $region44: #{tpu_custom_call.1} parent=1 // pred_region
      %131 = dma.done [#allocation4], 128
    $region45: #{tpu_custom_call.1} parent=1 // pred_fallthru
      _
    %132 = vsyncpa [#allocation3], 1
    %133 = vsyncpa [#allocation6], 1
    %134 = vsyncpa [#allocation9], 1
    %135 = vsyncpa [#allocation4], 1

</llo_original>
